<compile_context>
chip_gen: v7x
topology: tpu7x:2x2x1
jax: 0.10.0
libtpu: 0.0.40
codegen_flags: <defaults>
</compile_context>

<pallas_src>
import functools

import jax
import jax.numpy as jnp
from jax.experimental import pallas as pl
from jax.experimental.pallas import tpu as pltpu

LANES = 128
TR = 4096          # rows per streaming tile (tiled path): 2 MiB f32 per input
SMALL_ROWS = 4096  # single-step path handles up to SMALL_ROWS*128 elements


def _dice_small_kernel(x_ref, t_ref, o_ref, *, n, smooth, needs_mask):
    """Single grid step: whole problem in one (rows, 128) block."""
    x = x_ref[...]
    t = t_ref[...]
    p = jax.nn.sigmoid(x)
    if needs_mask:
        rows_i = jax.lax.broadcasted_iota(jnp.int32, x.shape, 0)
        lanes_i = jax.lax.broadcasted_iota(jnp.int32, x.shape, 1)
        valid = rows_i * LANES + lanes_i < n
        p = jnp.where(valid, p, 0.0)
        t = jnp.where(valid, t, 0.0)
    inter = jnp.sum(p * t, keepdims=True)                       # (1, 1)
    denom = jnp.sum(p, keepdims=True) + jnp.sum(t, keepdims=True) + smooth
    o_ref[...] = 1.0 - (2.0 * inter + smooth) / denom


def _dice_partial_kernel(x_ref, t_ref, oi_ref, od_ref, *,
                         n, chunk_steps, needs_mask):
    """Streaming path: accumulate vreg-shaped partial sums per parallel chunk."""
    s = pl.program_id(1)

    @pl.when(s == 0)
    def _():
        oi_ref[...] = jnp.zeros_like(oi_ref)
        od_ref[...] = jnp.zeros_like(od_ref)

    x = x_ref[...]
    t = t_ref[...]
    p = jax.nn.sigmoid(x)

    if needs_mask:
        c = pl.program_id(0)
        base = (c * chunk_steps + s) * (TR * LANES)
        ridx = jax.lax.broadcasted_iota(jnp.int32, (TR, LANES), 0)
        lidx = jax.lax.broadcasted_iota(jnp.int32, (TR, LANES), 1)
        # compare local index against (n - base): one cmp + selects per vreg
        valid = (ridx * LANES + lidx) < (n - base)
        p = jnp.where(valid, p, 0.0)
        t = jnp.where(valid, t, 0.0)

    # Fold the (TR, 128) tile into (8, 128) vreg-shaped partials using only
    # VALU adds across vregs; all cross-lane / cross-sublane XLU reduction is
    # deferred to the wrapper's tiny final reduce.  denom = sum(p) + sum(t)
    # is accumulated as a single partial (sum(p + t)).
    oi_ref[...] += jnp.sum((p * t).reshape(TR // 8, 8, LANES), axis=0)[None]
    od_ref[...] += jnp.sum((p + t).reshape(TR // 8, 8, LANES), axis=0)[None]


def dice_loss(inputs, targets, smooth=1.0):
    """Pallas DiceLoss forward. inputs/targets: any (matching) shape."""
    x = jnp.ravel(inputs).astype(jnp.float32)
    t = jnp.ravel(targets).astype(jnp.float32)
    # Note: binary targets could be streamed as bf16/int8 to cut HBM traffic;
    # kept f32 here to match the PyTorch reference numerics exactly.
    n = x.shape[0]
    smooth = float(smooth)

    # Reshape to (rows, 128) so the last dim maps onto the 128-lane axis.
    # A copying pad only happens when numel is not lane-aligned (<=127 zeros);
    # tail correctness is always handled by in-kernel masking, never by the
    # padding value.
    rows = -(-n // LANES)
    pad = rows * LANES - n
    if pad:
        x = jnp.pad(x, (0, pad))
        t = jnp.pad(t, (0, pad))
    x2 = x.reshape(rows, LANES)
    t2 = t.reshape(rows, LANES)

    if rows <= SMALL_ROWS:
        # --- single-step fast path (demo-sized inputs land here) ---
        needs_mask = rows * LANES != n
        kernel = functools.partial(_dice_small_kernel, n=n, smooth=smooth,
                                   needs_mask=needs_mask)
        out = pl.pallas_call(
            kernel,
            out_shape=jax.ShapeDtypeStruct((1, 1), jnp.float32),
            grid_spec=pltpu.PrefetchScalarGridSpec(
                num_scalar_prefetch=0,
                grid=(1,),
                in_specs=[
                    pl.BlockSpec((rows, LANES), lambda i: (0, 0)),
                    pl.BlockSpec((rows, LANES), lambda i: (0, 0)),
                ],
                out_specs=pl.BlockSpec((1, 1), lambda i: (0, 0)),
            ),
            compiler_params=pltpu.CompilerParams(
                dimension_semantics=("arbitrary",)),
        )(x2, t2)
        return out[0, 0]

    # --- tiled streaming path ---
    total_blocks = -(-rows // TR)
    num_chunks = 2 if (total_blocks % 2 == 0 and total_blocks >= 2) else 1
    chunk_steps = total_blocks // num_chunks
    needs_mask = total_blocks * TR * LANES != n

    kernel = functools.partial(_dice_partial_kernel, n=n,
                               chunk_steps=chunk_steps, needs_mask=needs_mask)
    part_shape = jax.ShapeDtypeStruct((num_chunks, 8, LANES), jnp.float32)
    part_spec = pl.BlockSpec((1, 8, LANES), lambda c, s: (c, 0, 0))
    in_spec = pl.BlockSpec((TR, LANES), lambda c, s: (c * chunk_steps + s, 0))

    pi, pd = pl.pallas_call(
        kernel,
        out_shape=(part_shape, part_shape),
        grid_spec=pltpu.PrefetchScalarGridSpec(
            num_scalar_prefetch=0,
            grid=(num_chunks, chunk_steps),
            in_specs=[in_spec, in_spec],
            out_specs=(part_spec, part_spec),
        ),
        compiler_params=pltpu.CompilerParams(
            dimension_semantics=("parallel", "arbitrary")),
    )(x2, t2)

    inter = jnp.sum(pi)
    dice = (2.0 * inter + smooth) / (jnp.sum(pd) + smooth)
    return 1.0 - dice


def _reference(inputs, targets, smooth=1.0):
    p = jax.nn.sigmoid(inputs.astype(jnp.float32)).ravel()
    t = targets.astype(jnp.float32).ravel()
    inter = jnp.sum(p * t)
    dice = (2.0 * inter + smooth) / (jnp.sum(p) + jnp.sum(t) + smooth)
    return 1.0 - dice


if __name__ == "__main__":
    key = jax.random.PRNGKey(0)

    # 1) Module-sized NCHW input (single-step fast path, no masking needed).
    k1, k2, key = jax.random.split(key, 3)
    x = jax.random.normal(k1, (2, 4, 16, 16), dtype=jnp.float32)
    t = (jax.random.uniform(k2, (2, 4, 16, 16)) > 0.5).astype(jnp.float32)
    loss = dice_loss(x, t)
    jax.block_until_ready(loss)
    ref = _reference(x, t)
    assert jnp.allclose(loss, ref, atol=1e-5, rtol=1e-5), (loss, ref)

    # 2) Non-lane-aligned size (single-step path with in-kernel tail masking).
    k1, k2, key = jax.random.split(key, 3)
    x = jax.random.normal(k1, (1019,), dtype=jnp.float32)
    t = (jax.random.uniform(k2, (1019,)) > 0.5).astype(jnp.float32)
    loss = dice_loss(x, t)
    jax.block_until_ready(loss)
    ref = _reference(x, t)
    assert jnp.allclose(loss, ref, atol=1e-5, rtol=1e-5), (loss, ref)

    # 3) Larger input: tiled streaming path, 2 parallel chunks + tail masking.
    k1, k2, key = jax.random.split(key, 3)
    x = jax.random.normal(k1, (2, 8, 256, 255), dtype=jnp.float32)
    t = (jax.random.uniform(k2, (2, 8, 256, 255)) > 0.5).astype(jnp.float32)
    loss = dice_loss(x, t)
    jax.block_until_ready(loss)
    ref = _reference(x, t)
    assert jnp.allclose(loss, ref, atol=1e-4, rtol=1e-4), (loss, ref)

    print("KERNEL_OK")
</pallas_src>

<mosaic_0001>
module attributes {stable_mosaic.version = 11 : i64} {
  func.func @_dice_small_kernel(%arg0: i32, %arg1: memref<16x128xf32, #tpu.memory_space<vmem>>, %arg2: memref<16x128xf32, #tpu.memory_space<vmem>>, %arg3: memref<1x1xf32, #tpu.memory_space<vmem>>) attributes {dimension_semantics = [#tpu.dimension_semantics<arbitrary>], iteration_bounds = array<i64: 1>, scalar_prefetch = 0 : i64, scratch_operands = 0 : i64, tpu.core_type = #tpu.core_type<tc>, window_params = [{pipeline_mode = #tpu.pipeline_mode<synchronous>, transform_indices = @transform_0, window_bounds = array<i64: 16, 128>}, {pipeline_mode = #tpu.pipeline_mode<synchronous>, transform_indices = @transform_1, window_bounds = array<i64: 16, 128>}, {pipeline_mode = #tpu.pipeline_mode<synchronous>, transform_indices = @transform_2, window_bounds = array<i64: 1, 1>}]} {
    %c0 = arith.constant 0 : index
    %c0_0 = arith.constant 0 : index
    %0 = vector.load %arg1[%c0, %c0_0] : memref<16x128xf32, #tpu.memory_space<vmem>>, vector<16x128xf32>
    %c0_1 = arith.constant 0 : index
    %c0_2 = arith.constant 0 : index
    %1 = vector.load %arg2[%c0_1, %c0_2] : memref<16x128xf32, #tpu.memory_space<vmem>>, vector<16x128xf32>
    %2 = arith.negf %0 : vector<16x128xf32>
    %3 = math.exp %2 : vector<16x128xf32>
    %cst = arith.constant 1.000000e+00 : f32
    %4 = vector.broadcast %cst : f32 to vector<16x128xf32>
    %5 = arith.addf %4, %3 : vector<16x128xf32>
    %6 = arith.divf %4, %5 : vector<16x128xf32>
    %7 = arith.mulf %6, %1 : vector<16x128xf32>
    %8 = vector.shape_cast %7 : vector<16x128xf32> to vector<1x16x128xf32>
    %cst_3 = arith.constant dense<0.000000e+00> : vector<1xf32>
    %9 = vector.multi_reduction <add>, %8, %cst_3 [1, 2] : vector<1x16x128xf32> to vector<1xf32>
    %10 = vector.shape_cast %9 : vector<1xf32> to vector<1x1x1xf32>
    %11 = vector.extract %10[0, 0, 0] : f32 from vector<1x1x1xf32>
    %12 = vector.broadcast %11 : f32 to vector<1x1xf32>
    %13 = vector.shape_cast %6 : vector<16x128xf32> to vector<1x16x128xf32>
    %cst_4 = arith.constant dense<0.000000e+00> : vector<1xf32>
    %14 = vector.multi_reduction <add>, %13, %cst_4 [1, 2] : vector<1x16x128xf32> to vector<1xf32>
    %15 = vector.shape_cast %14 : vector<1xf32> to vector<1x1x1xf32>
    %16 = vector.extract %15[0, 0, 0] : f32 from vector<1x1x1xf32>
    %17 = vector.broadcast %16 : f32 to vector<1x1xf32>
    %18 = vector.shape_cast %1 : vector<16x128xf32> to vector<1x16x128xf32>
    %cst_5 = arith.constant dense<0.000000e+00> : vector<1xf32>
    %19 = vector.multi_reduction <add>, %18, %cst_5 [1, 2] : vector<1x16x128xf32> to vector<1xf32>
    %20 = vector.shape_cast %19 : vector<1xf32> to vector<1x1x1xf32>
    %21 = vector.extract %20[0, 0, 0] : f32 from vector<1x1x1xf32>
    %22 = vector.broadcast %21 : f32 to vector<1x1xf32>
    %23 = arith.addf %17, %22 : vector<1x1xf32>
    %cst_6 = arith.constant 1.000000e+00 : f32
    %24 = vector.broadcast %cst_6 : f32 to vector<1x1xf32>
    %25 = arith.addf %23, %24 : vector<1x1xf32>
    %cst_7 = arith.constant 2.000000e+00 : f32
    %26 = vector.broadcast %cst_7 : f32 to vector<1x1xf32>
    %27 = arith.mulf %26, %12 : vector<1x1xf32>
    %cst_8 = arith.constant 1.000000e+00 : f32
    %28 = vector.broadcast %cst_8 : f32 to vector<1x1xf32>
    %29 = arith.addf %27, %28 : vector<1x1xf32>
    %30 = arith.divf %29, %25 : vector<1x1xf32>
    %cst_9 = arith.constant 1.000000e+00 : f32
    %31 = vector.broadcast %cst_9 : f32 to vector<1x1xf32>
    %32 = arith.subf %31, %30 : vector<1x1xf32>
    %c0_10 = arith.constant 0 : index
    %c0_11 = arith.constant 0 : index
    %33 = vector.load %arg3[%c0_10, %c0_11] : memref<1x1xf32, #tpu.memory_space<vmem>>, vector<1x1xf32>
    tpu.vector_store %arg3[%c0_10, %c0_11], %32 {strides = array<i32>} : memref<1x1xf32, #tpu.memory_space<vmem>>, vector<1x1xf32>,
    return
  }
  func.func @transform_0(%arg0: i32) -> (i32, i32) {
    %c0_i32 = arith.constant 0 : i32
    %c0_i32_0 = arith.constant 0 : i32
    %c0_i32_1 = arith.constant 0 : i32
    return %c0_i32, %c0_i32_0 : i32, i32
  }
  func.func @transform_1(%arg0: i32) -> (i32, i32) {
    %c0_i32 = arith.constant 0 : i32
    %c0_i32_0 = arith.constant 0 : i32
    %c0_i32_1 = arith.constant 0 : i32
    return %c0_i32, %c0_i32_0 : i32, i32
  }
  func.func @transform_2(%arg0: i32) -> (i32, i32) {
    %c0_i32 = arith.constant 0 : i32
    %c0_i32_0 = arith.constant 0 : i32
    %c0_i32_1 = arith.constant 0 : i32
    return %c0_i32, %c0_i32_0 : i32, i32
  }
}

</mosaic_0001>

<llo_original>
// kernel: tpu_custom_call.1
$region0: #{tpu_custom_call.1}
  #allocation0 [shape = 'u32[]', space=smem, size = 0x4, offset = 0x4, fixed_abs, tag = 'smem constant byte address 0x4 - core index']
  #allocation1 [shape = 'u32[144,128]{1,0:T(1,128)}', space=vmem, size = 0x12000, scoped, tag = 'internal scratch']
  %s0 = inlined_call_operand.hbm [shape: f32[16,128], index: 0, kind: input, shape index: {}]
  %s1 = inlined_call_operand.hbm [shape: f32[16,128], index: 1, kind: input, shape index: {}]
  %s2 = inlined_call_operand.hbm [shape: f32[1,1], index: 2, kind: output, shape index: {}]
  %s3 = sld [smem:[#allocation0]]
  $region26: #{tpu_custom_call.1} parent=0
    _
  %s5 = ssub.s32 1, %s3
  %s6 = scalar_select 0, %s5, %s3
  $region1: #{tpu_custom_call.1} parent=0
    #allocation2 [shape = 'u8[8192]{0}', space=vmem, size = 0x2000, scoped, tag = 'input window, operand 0, single buffered']
    #allocation3 [shape = 's32[1]{0}', space=sflag, size = 0x4, scoped, tag = 'scoped memory for tpu_custom_call.1']
    #allocation4 [shape = 's32[1]{0}', space=sflag, size = 0x4, scoped, tag = 'scoped memory for tpu_custom_call.1']
    #allocation5 [shape = 'u8[8192]{0}', space=vmem, size = 0x2000, scoped, tag = 'input window, operand 1, single buffered']
    #allocation6 [shape = 's32[1]{0}', space=sflag, size = 0x4, scoped, tag = 'scoped memory for tpu_custom_call.1']
    #allocation7 [shape = 'u8[512]{0}', space=vmem, size = 0x400, scoped, tag = 'output window, operand 0, single buffered']
    %7 = vsyncpa [#allocation3], 0
    %8 = vsyncpa [#allocation6], 0
    %9 = vsyncpa [#allocation4], 0
    // Predicated region
    $region2: #{tpu_custom_call.1} parent=1 // pred_check
      _
    $region3: #{tpu_custom_call.1} parent=1 // pred_check_branch
      %11 = sbr.rel (0) target = $region5
    $region4: #{tpu_custom_call.1} parent=1 // pred_region
      %s13 = ssub.s32 256, 256
      %14 = vsyncadd [#allocation3], %s13
      %s15 = sshll.u32 [#allocation2], 4
      %s16 = int_to_ptr.vmem [resolvable:$true] %s15
      %21 = dma.hbm_to_vmem [thread:$0]  %s0, 256, %s16, [#allocation3], 128, 128, 8
    $region5: #{tpu_custom_call.1} parent=1 // pred_fallthru
      _
    // Predicated region
    $region6: #{tpu_custom_call.1} parent=1 // pred_check
      _
    $region7: #{tpu_custom_call.1} parent=1 // pred_check_branch
      %23 = sbr.rel (0) target = $region9
    $region8: #{tpu_custom_call.1} parent=1 // pred_region
      %s25 = ssub.s32 256, 256
      %26 = vsyncadd [#allocation6], %s25
      %s27 = sshll.u32 [#allocation5], 4
      %s28 = int_to_ptr.vmem [resolvable:$true] %s27
      %33 = dma.hbm_to_vmem [thread:$0]  %s1, 256, %s28, [#allocation6], 128, 128, 8
    $region9: #{tpu_custom_call.1} parent=1 // pred_fallthru
      _
    // Predicated region
    $region10: #{tpu_custom_call.1} parent=1 // pred_check
      _
    $region11: #{tpu_custom_call.1} parent=1 // pred_check_branch
      %35 = sbr.rel (0) target = $region13
    $region12: #{tpu_custom_call.1} parent=1 // pred_region
      %36 = dma.done [#allocation3], 256
    $region13: #{tpu_custom_call.1} parent=1 // pred_fallthru
      _
    // Predicated region
    $region14: #{tpu_custom_call.1} parent=1 // pred_check
      _
    $region15: #{tpu_custom_call.1} parent=1 // pred_check_branch
      %38 = sbr.rel (0) target = $region17
    $region16: #{tpu_custom_call.1} parent=1 // pred_region
      %39 = dma.done [#allocation6], 256
    $region17: #{tpu_custom_call.1} parent=1 // pred_fallthru
      _
    %v40 = vld [vmem:[#allocation2] sm:$0xff]
    %v41 = vld [vmem:[#allocation2 + $0x8] sm:$0xff]
    %v42 = vld [vmem:[#allocation5] sm:$0xff]
    %v43 = vld [vmem:[#allocation5 + $0x8] sm:$0xff]
    %v44 = vxor.u32 %v40, 2147483648
    %v45 = vxor.u32 %v41, 2147483648
    %v46 = vmul.f32 %v44, 1.442695
    %v47 = vpow.pop %v46
    %v48 = vmul.f32 %v45, 1.442695
    %v49 = vpow.pop %v48
    %v50 = vadd.f32 %v47, 1.0
    %v51 = vadd.f32 %v49, 1.0
    %v52 = vrcp.pop %v50
    %v53 = vmul.f32 1.0, %v52
    %v54 = vrcp.pop %v51
    %v55 = vmul.f32 1.0, %v54
    %v56 = vmul.f32 %v53, %v42
    %v57 = vmul.f32 %v55, %v43
    %v58 = vadd.f32 %v56, %v57
    %59 = vadd.xlane.f32.xlu0 %v58
    %v60 = vpop.xlane.xlu0 %59
    %v61 = vrot.slane %v60, 4
    %v62 = vadd.f32 %v60, %v61
    %v63 = vrot.slane %v62, 2
    %v64 = vadd.f32 %v62, %v63
    %v65 = vrot.slane %v64, 1
    %v66 = vadd.f32 %v64, %v65
    %s67 = vtos %v66
    %v68 = vstv %s67
    %v69 = vadd.f32 %v53, %v55
    %70 = vadd.xlane.f32.xlu0 %v69
    %v71 = vpop.xlane.xlu0 %70
    %v72 = vrot.slane %v71, 4
    %v73 = vadd.f32 %v71, %v72
    %v74 = vrot.slane %v73, 2
    %v75 = vadd.f32 %v73, %v74
    %v76 = vrot.slane %v75, 1
    %v77 = vadd.f32 %v75, %v76
    %s78 = vtos %v77
    %v79 = vstv %s78
    %v80 = vadd.f32 %v42, %v43
    %81 = vadd.xlane.f32.xlu0 %v80
    %v82 = vpop.xlane.xlu0 %81
    %v83 = vrot.slane %v82, 4
    %v84 = vadd.f32 %v82, %v83
    %v85 = vrot.slane %v84, 2
    %v86 = vadd.f32 %v84, %v85
    %v87 = vrot.slane %v86, 1
    %v88 = vadd.f32 %v86, %v87
    %s89 = vtos %v88
    %v90 = vstv %s89
    %v91 = vadd.f32 %v79, %v90
    %v92 = vadd.f32 %v91, 1.0
    %v93 = vmul.f32 %v68, 2.0
    %v94 = vadd.f32 %v93, 1.0
    %v95 = vrcp.pop %v92
    %v96 = vmul.f32 %v94, %v95
    %v97 = vsub.f32 1.0, %v96
    %vm98 = vcmask 0
    %99 = vst.msk [vmem:[#allocation7] sm:$0x1] %vm98, %v97
    // Predicated region
    $region18: #{tpu_custom_call.1} parent=1 // pred_check
      _
    $region19: #{tpu_custom_call.1} parent=1 // pred_check_branch
      %101 = sbr.rel (0) target = $region21
    $region20: #{tpu_custom_call.1} parent=1 // pred_region
      %s103 = ssub.s32 16, 16
      %104 = vsyncadd [#allocation4], %s103
      %s106 = sshll.u32 [#allocation7], 4
      %s107 = int_to_ptr.vmem [resolvable:$true] %s106
      %109 = dma.vmem_to_hbm [thread:$0]  %s107, 16, %s2, [#allocation4]
    $region21: #{tpu_custom_call.1} parent=1 // pred_fallthru
      _
    // Predicated region
    $region22: #{tpu_custom_call.1} parent=1 // pred_check
      _
    $region23: #{tpu_custom_call.1} parent=1 // pred_check_branch
      %111 = sbr.rel (0) target = $region25
    $region24: #{tpu_custom_call.1} parent=1 // pred_region
      %112 = dma.done [#allocation4], 16
    $region25: #{tpu_custom_call.1} parent=1 // pred_fallthru
      _
    %113 = vsyncpa [#allocation3], 1
    %114 = vsyncpa [#allocation6], 1
    %115 = vsyncpa [#allocation4], 1

</llo_original>
